<compile_context>
chip_gen: v5e
topology: v5e:2x2
jax: 0.10.0
libtpu: 0.0.40
codegen_flags: <defaults>
</compile_context>

<pallas_src>
import jax
import jax.numpy as jnp
from jax.experimental import pallas as pl
from jax.experimental.pallas import tpu as pltpu


def make_kernel(normalize_attn: bool, hw: int, use_mxu: bool, gout_2d: bool):
    inv_hw = 1.0 / float(hw)

    def kernel(w_ref, l_ref, g_ref, c_ref, gout_ref):
        # w_ref:       (1, C)         1x1-conv weight (out_channels=1, no bias)
        # l_ref/g_ref: (Nb, C, HW)    batched input blocks
        # c_ref:       (Nb, 1, HW)    raw conv output (attention logits)
        # gout_ref:    (Nb, C) or (Nb, C, 1)  pooled output
        w = w_ref[...].astype(jnp.float32)            # (1, C)
        l = l_ref[...].astype(jnp.float32)            # (Nb, C, HW)
        g = g_ref[...].astype(jnp.float32)            # (Nb, C, HW)

        x = l + g                                     # (Nb, C, HW)

        # 1x1 conv over channels == per-pixel weighted channel sum.
        if use_mxu:
            # Realistic C: channel contraction on the MXU (batched matmul).
            c = jnp.einsum("oc,nch->noh", w, x,
                           preferred_element_type=jnp.float32)        # (Nb,1,HW)
        else:
            # Tiny C: broadcast-multiply + channel sum on the VPU/XLU.
            c = jnp.sum(x * w[:, :, None], axis=1, keepdims=True)     # (Nb,1,HW)
        c_ref[...] = c.astype(c_ref.dtype)

        if normalize_attn:
            # Softmax over the flattened spatial dim, per batch element.
            m = jnp.max(c, axis=-1, keepdims=True)                    # (Nb,1,1)
            e = jnp.exp(c - m)
            s = jnp.sum(e, axis=-1, keepdims=True)
            a = e * pl.reciprocal(s, approx=True)                     # (Nb,1,HW)
        else:
            # Sigmoid gate; fold the adaptive_avg_pool2d 1/HW into the gate.
            a = jax.nn.sigmoid(c) * inv_hw                            # (Nb,1,HW)

        # TODO(synk): for large C the spatial contraction below could also be
        # mapped onto the MXU (dot over HW); kept on the VPU/XLU here since the
        # kernel is HBM-bound at realistic sizes.
        weighted = l * a                                              # (Nb,C,HW)
        if gout_2d:
            gout_ref[...] = jnp.sum(weighted, axis=-1).astype(gout_ref.dtype)
        else:
            gout_ref[...] = jnp.sum(weighted, axis=-1,
                                    keepdims=True).astype(gout_ref.dtype)

    return kernel


def _choose_block_n(N, C, HW, itemsize, target_bytes=2 << 20):
    """Batch elements per grid step.

    ~MiB-scale input blocks (amortize per-step overhead / DMA setup), a
    multiple of 8 when possible (dense sublanes, tile-aligned 2-D outputs),
    and >= 2 grid steps when the batch allows (v7x two-TC split).
    """
    per_n = max(1, C * HW * itemsize)
    nb = int(max(1, min(target_bytes // per_n, N)))
    if nb >= N:
        if N >= 16:
            # Whole batch fits comfortably: split into >=2 steps, mult. of 8.
            nb = ((pl.cdiv(N, 2) + 7) // 8) * 8
        else:
            nb = N                       # tiny batch: single block
    elif nb >= 8:
        nb = (nb // 8) * 8
    # else (huge C*HW): a few batch rows per block.
    # TODO(synk): for C*HW rows larger than ~2 MiB, tile HW with an
    # online-softmax accumulator instead of shrinking the batch block.
    return nb


def spatial_attention_block(l, g, w, normalize_attn=True, block_n=None):
    """l, g: (N, C, H, W). w: (1, C, 1, 1) conv weight. Returns (c, g_out)."""
    N, C, H, W = l.shape
    HW = H * W
    l2 = l.reshape(N, C, HW)
    g2 = g.reshape(N, C, HW)
    w2 = w.reshape(1, C)

    if block_n is None:
        block_n = _choose_block_n(N, C, HW, jnp.dtype(l.dtype).itemsize)
    num_blocks = pl.cdiv(N, block_n)
    n_pad = num_blocks * block_n
    if n_pad != N:
        pad = ((0, n_pad - N), (0, 0), (0, 0))
        l2 = jnp.pad(l2, pad)
        g2 = jnp.pad(g2, pad)

    # Pooled output as a dense (N, C) slab whenever its block is tile-legal
    # (block_n multiple of 8, or single full-batch block); else (N, C, 1).
    gout_2d = (num_blocks == 1) or (block_n % 8 == 0)
    use_mxu = C >= 128

    if gout_2d:
        gout_shape = jax.ShapeDtypeStruct((n_pad, C), l.dtype)
        gout_spec = pl.BlockSpec((block_n, C), lambda n: (n, 0))
    else:
        gout_shape = jax.ShapeDtypeStruct((n_pad, C, 1), l.dtype)
        gout_spec = pl.BlockSpec((block_n, C, 1), lambda n: (n, 0, 0))

    c_out, g_out = pl.pallas_call(
        make_kernel(normalize_attn, HW, use_mxu, gout_2d),
        out_shape=(
            jax.ShapeDtypeStruct((n_pad, 1, HW), l.dtype),   # logits, HW lane-dense
            gout_shape,
        ),
        grid_spec=pltpu.PrefetchScalarGridSpec(
            num_scalar_prefetch=0,
            grid=(num_blocks,),
            in_specs=[
                pl.BlockSpec((1, C), lambda n: (0, 0)),               # conv weight
                pl.BlockSpec((block_n, C, HW), lambda n: (n, 0, 0)),  # l
                pl.BlockSpec((block_n, C, HW), lambda n: (n, 0, 0)),  # g
            ],
            out_specs=[
                pl.BlockSpec((block_n, 1, HW), lambda n: (n, 0, 0)),  # logits
                gout_spec,                                            # pooled g
            ],
        ),
        compiler_params=pltpu.CompilerParams(
            dimension_semantics=("parallel",)),
    )(w2, l2, g2)

    c_out = c_out[:N].reshape(N, 1, H, W)
    g_out = g_out[:N].reshape(N, C)
    return c_out, g_out


def ref_forward(l, g, w, normalize_attn=True):
    """Pure-JAX reference mirroring the PyTorch module exactly."""
    N, C, H, W = l.shape
    x = l + g
    c = jnp.einsum("nchw,c->nhw", x, w.reshape(C))[:, None, :, :]  # (N,1,H,W)
    if normalize_attn:
        a = jax.nn.softmax(c.reshape(N, 1, -1), axis=2).reshape(N, 1, H, W)
        gout = (a * l).reshape(N, C, -1).sum(axis=2)
    else:
        a = jax.nn.sigmoid(c)
        gout = (a * l).mean(axis=(2, 3))
    return c, gout


def _check(N, C, H, W, key, normalize_attn, block_n=None, atol=1e-5, rtol=1e-5):
    k_l, k_g, k_w = jax.random.split(key, 3)
    l = jax.random.normal(k_l, (N, C, H, W), dtype=jnp.float32)
    g = jax.random.normal(k_g, (N, C, H, W), dtype=jnp.float32)
    w = jax.random.normal(k_w, (1, C, 1, 1), dtype=jnp.float32) * (1.0 / (C ** 0.5))

    c_out, g_out = spatial_attention_block(l, g, w, normalize_attn=normalize_attn,
                                           block_n=block_n)
    jax.block_until_ready((c_out, g_out))

    c_ref, g_ref = ref_forward(l, g, w, normalize_attn=normalize_attn)
    assert c_out.shape == (N, 1, H, W) and g_out.shape == (N, C)
    assert jnp.allclose(c_out, c_ref, atol=1e-5, rtol=1e-5)
    assert jnp.allclose(g_out, g_ref, atol=atol, rtol=rtol)


if __name__ == "__main__":
    key = jax.random.PRNGKey(0)
    k0, k1, k2, k3 = jax.random.split(key, 4)

    # Spec shapes: batch=2, channels=4, spatial=16x16. Both attention modes.
    # (approx reciprocal in the softmax denominator -> slightly looser gout tol)
    _check(2, 4, 16, 16, k0, normalize_attn=True, atol=2e-3, rtol=2e-3)
    _check(2, 4, 16, 16, k1, normalize_attn=False, atol=1e-4, rtol=1e-4)

    # Multi-step grid + batch padding path (block_n=16 -> grid=2, pad 20->32).
    _check(20, 4, 16, 16, k2, normalize_attn=True, atol=2e-3, rtol=2e-3)

    # Fallback (N, C, 1) pooled-output layout path (block_n not a multiple of 8).
    _check(6, 4, 16, 16, k3, normalize_attn=False, block_n=3, atol=1e-4, rtol=1e-4)

    print("KERNEL_OK")
</pallas_src>

<mosaic_0001>
module attributes {stable_mosaic.version = 11 : i64} {
  func.func @kernel(%arg0: i32, %arg1: memref<1x4xf32, #tpu.memory_space<vmem>>, %arg2: memref<2x4x256xf32, #tpu.memory_space<vmem>>, %arg3: memref<2x4x256xf32, #tpu.memory_space<vmem>>, %arg4: memref<2x1x256xf32, #tpu.memory_space<vmem>>, %arg5: memref<2x4xf32, #tpu.memory_space<vmem>>) attributes {dimension_semantics = [#tpu.dimension_semantics<parallel>], iteration_bounds = array<i64: 1>, scalar_prefetch = 0 : i64, scratch_operands = 0 : i64, tpu.core_type = #tpu.core_type<tc>, window_params = [{pipeline_mode = #tpu.pipeline_mode<synchronous>, transform_indices = @transform_0, window_bounds = array<i64: 1, 4>}, {transform_indices = @transform_1, window_bounds = array<i64: 2, 4, 256>}, {transform_indices = @transform_2, window_bounds = array<i64: 2, 4, 256>}, {transform_indices = @transform_3, window_bounds = array<i64: 2, 1, 256>}, {transform_indices = @transform_4, window_bounds = array<i64: 2, 4>}]} {
    %c0 = arith.constant 0 : index
    %c0_0 = arith.constant 0 : index
    %0 = vector.load %arg1[%c0, %c0_0] : memref<1x4xf32, #tpu.memory_space<vmem>>, vector<1x4xf32>
    %c0_1 = arith.constant 0 : index
    %c0_2 = arith.constant 0 : index
    %c0_3 = arith.constant 0 : index
    %1 = vector.load %arg2[%c0_1, %c0_2, %c0_3] : memref<2x4x256xf32, #tpu.memory_space<vmem>>, vector<2x4x256xf32>
    %c0_4 = arith.constant 0 : index
    %c0_5 = arith.constant 0 : index
    %c0_6 = arith.constant 0 : index
    %2 = vector.load %arg3[%c0_4, %c0_5, %c0_6] : memref<2x4x256xf32, #tpu.memory_space<vmem>>, vector<2x4x256xf32>
    %3 = arith.addf %1, %2 : vector<2x4x256xf32>
    %4 = vector.shape_cast %0 : vector<1x4xf32> to vector<1x4x1xf32>
    %5 = vector.broadcast %4 : vector<1x4x1xf32> to vector<2x4x256xf32>
    %6 = arith.mulf %3, %5 : vector<2x4x256xf32>
    %cst = arith.constant dense<0.000000e+00> : vector<2x256xf32>
    %7 = vector.multi_reduction <add>, %6, %cst [1] : vector<2x4x256xf32> to vector<2x256xf32>
    %8 = vector.shape_cast %7 : vector<2x256xf32> to vector<2x1x256xf32>
    %c0_7 = arith.constant 0 : index
    %c0_8 = arith.constant 0 : index
    %c0_9 = arith.constant 0 : index
    %9 = vector.load %arg4[%c0_7, %c0_8, %c0_9] : memref<2x1x256xf32, #tpu.memory_space<vmem>>, vector<2x1x256xf32>
    tpu.vector_store %arg4[%c0_7, %c0_8, %c0_9], %8 {strides = array<i32>} : memref<2x1x256xf32, #tpu.memory_space<vmem>>, vector<2x1x256xf32>,
    %cst_10 = arith.constant dense<0xFF800000> : vector<2x1xf32>
    %10 = vector.multi_reduction <maximumf>, %8, %cst_10 [2] : vector<2x1x256xf32> to vector<2x1xf32>
    %11 = vector.shape_cast %10 : vector<2x1xf32> to vector<2x1x1xf32>
    %12 = vector.broadcast %11 : vector<2x1x1xf32> to vector<2x1x256xf32>
    %13 = arith.subf %8, %12 : vector<2x1x256xf32>
    %14 = math.exp %13 : vector<2x1x256xf32>
    %cst_11 = arith.constant dense<0.000000e+00> : vector<2x1xf32>
    %15 = vector.multi_reduction <add>, %14, %cst_11 [2] : vector<2x1x256xf32> to vector<2x1xf32>
    %16 = vector.shape_cast %15 : vector<2x1xf32> to vector<2x1x1xf32>
    %17 = tpu.reciprocal %16 {approx = true} : vector<2x1x1xf32> -> vector<2x1x1xf32>
    %18 = vector.broadcast %17 : vector<2x1x1xf32> to vector<2x1x256xf32>
    %19 = arith.mulf %14, %18 : vector<2x1x256xf32>
    %20 = vector.broadcast %19 : vector<2x1x256xf32> to vector<2x4x256xf32>
    %21 = arith.mulf %1, %20 : vector<2x4x256xf32>
    %cst_12 = arith.constant dense<0.000000e+00> : vector<2x4xf32>
    %22 = vector.multi_reduction <add>, %21, %cst_12 [2] : vector<2x4x256xf32> to vector<2x4xf32>
    %c0_13 = arith.constant 0 : index
    %c0_14 = arith.constant 0 : index
    %23 = vector.load %arg5[%c0_13, %c0_14] : memref<2x4xf32, #tpu.memory_space<vmem>>, vector<2x4xf32>
    tpu.vector_store %arg5[%c0_13, %c0_14], %22 {strides = array<i32>} : memref<2x4xf32, #tpu.memory_space<vmem>>, vector<2x4xf32>,
    return
  }
  func.func @transform_0(%arg0: i32) -> (i32, i32) {
    %c0_i32 = arith.constant 0 : i32
    %c0_i32_0 = arith.constant 0 : i32
    %c0_i32_1 = arith.constant 0 : i32
    return %c0_i32, %c0_i32_0 : i32, i32
  }
  func.func @transform_1(%arg0: i32) -> (i32, i32, i32) {
    %c0_i32 = arith.constant 0 : i32
    %c0_i32_0 = arith.constant 0 : i32
    %c0_i32_1 = arith.constant 0 : i32
    return %arg0, %c0_i32, %c0_i32_0 : i32, i32, i32
  }
  func.func @transform_2(%arg0: i32) -> (i32, i32, i32) {
    %c0_i32 = arith.constant 0 : i32
    %c0_i32_0 = arith.constant 0 : i32
    %c0_i32_1 = arith.constant 0 : i32
    return %arg0, %c0_i32, %c0_i32_0 : i32, i32, i32
  }
  func.func @transform_3(%arg0: i32) -> (i32, i32, i32) {
    %c0_i32 = arith.constant 0 : i32
    %c0_i32_0 = arith.constant 0 : i32
    %c0_i32_1 = arith.constant 0 : i32
    return %arg0, %c0_i32, %c0_i32_0 : i32, i32, i32
  }
  func.func @transform_4(%arg0: i32) -> (i32, i32) {
    %c0_i32 = arith.constant 0 : i32
    %c0_i32_0 = arith.constant 0 : i32
    return %arg0, %c0_i32 : i32, i32
  }
}

</mosaic_0001>

<llo_original>
// kernel: tpu_custom_call.1
$region0: #{tpu_custom_call.1}
  #allocation0 [shape = 'u32[]', space=smem, size = 0x4, offset = 0x4, fixed_abs, tag = 'smem constant byte address 0x4 - core index']
  #allocation1 [shape = 'u32[72,128]{1,0:T(1,128)}', space=vmem, size = 0x9000, scoped, tag = 'internal scratch']
  %s0 = inlined_call_operand.hbm [shape: f32[1,4], index: 0, kind: input, shape index: {}]
  %s1 = inlined_call_operand.hbm [shape: f32[2,4,256], index: 1, kind: input, shape index: {}]
  %s2 = inlined_call_operand.hbm [shape: f32[2,4,256], index: 2, kind: input, shape index: {}]
  %s3 = inlined_call_operand.hbm [shape: f32[2,1,256], index: 3, kind: output, shape index: {0}]
  %s4 = inlined_call_operand.hbm [shape: f32[2,4], index: 4, kind: output, shape index: {1}]
  %5 = xla_tuple %s3, %s4
  %s6 = sld [smem:[#allocation0]]
  $region42: #{tpu_custom_call.1} parent=0
    _
  %s8 = ssub.s32 1, %s6
  %s9 = scalar_select 0, %s8, %s6
  $region1: #{tpu_custom_call.1} parent=0
    #allocation2 [shape = 'u8[512]{0}', space=vmem, size = 0x400, scoped, tag = 'input window, operand 0, single buffered']
    #allocation3 [shape = 's32[1]{0}', space=sflag, size = 0x4, scoped, tag = 'scoped memory for tpu_custom_call.1']
    #allocation4 [shape = 's32[1]{0}', space=sflag, size = 0x4, scoped, tag = 'scoped memory for tpu_custom_call.1']
    #allocation5 [shape = 'u8[8192]{0}', space=vmem, size = 0x2000, scoped, tag = 'input window, operand 1, single buffered']
    #allocation6 [shape = 's32[1]{0}', space=sflag, size = 0x4, scoped, tag = 'scoped memory for tpu_custom_call.1']
    #allocation7 [shape = 'u8[8192]{0}', space=vmem, size = 0x2000, scoped, tag = 'input window, operand 2, single buffered']
    #allocation8 [shape = 'u8[2048]{0}', space=vmem, size = 0x800, scoped, tag = 'output window, operand 0, single buffered']
    #allocation9 [shape = 'u8[1024]{0}', space=vmem, size = 0x400, scoped, tag = 'output window, operand 1, single buffered']
    #allocation10 [shape = 's32[1]{0}', space=sflag, size = 0x4, scoped, tag = 'scoped memory for tpu_custom_call.1']
    %10 = vsyncpa [#allocation3], 0
    %11 = vsyncpa [#allocation6], 0
    %12 = vsyncpa [#allocation4], 0
    %13 = vsyncpa [#allocation10], 0
    // Predicated region
    $region2: #{tpu_custom_call.1} parent=1 // pred_check
      _
    $region3: #{tpu_custom_call.1} parent=1 // pred_check_branch
      %15 = sbr.rel (0) target = $region5
    $region4: #{tpu_custom_call.1} parent=1 // pred_region
      %17 = vsyncadd [#allocation3], 0
      %s19 = sshll.u32 %s0, 4
      %s20 = int_to_ptr.hbm [resolvable:$true] %s19
      %s21 = sshll.u32 [#allocation2], 4
      %s22 = int_to_ptr.vmem [resolvable:$true] %s21
      %24 = dma.hbm_to_vmem [thread:$0]  %s20, 16, %s22, [#allocation3]
    $region5: #{tpu_custom_call.1} parent=1 // pred_fallthru
      _
    // Predicated region
    $region6: #{tpu_custom_call.1} parent=1 // pred_check
      _
    $region7: #{tpu_custom_call.1} parent=1 // pred_check_branch
      %26 = sbr.rel (0) target = $region9
    $region8: #{tpu_custom_call.1} parent=1 // pred_region
      %28 = vsyncadd [#allocation6], 0
      %s29 = sshll.u32 %s1, 4
      %s30 = int_to_ptr.hbm [resolvable:$true] %s29
      %s31 = sshll.u32 [#allocation5], 4
      %s32 = int_to_ptr.vmem [resolvable:$true] %s31
      %37 = dma.hbm_to_vmem [thread:$0]  %s30, 256, %s32, [#allocation6], 128, 128, 8
    $region9: #{tpu_custom_call.1} parent=1 // pred_fallthru
      _
    // Predicated region
    $region10: #{tpu_custom_call.1} parent=1 // pred_check
      _
    $region11: #{tpu_custom_call.1} parent=1 // pred_check_branch
      %39 = sbr.rel (0) target = $region13
    $region12: #{tpu_custom_call.1} parent=1 // pred_region
      %41 = vsyncadd [#allocation6], 0
      %s42 = sshll.u32 %s2, 4
      %s43 = int_to_ptr.hbm [resolvable:$true] %s42
      %s44 = sshll.u32 [#allocation7], 4
      %s45 = int_to_ptr.vmem [resolvable:$true] %s44
      %50 = dma.hbm_to_vmem [thread:$0]  %s43, 256, %s45, [#allocation6], 128, 128, 8
    $region13: #{tpu_custom_call.1} parent=1 // pred_fallthru
      _
    // Predicated region
    $region14: #{tpu_custom_call.1} parent=1 // pred_check
      _
    $region15: #{tpu_custom_call.1} parent=1 // pred_check_branch
      %52 = sbr.rel (0) target = $region17
    $region16: #{tpu_custom_call.1} parent=1 // pred_region
      %54 = dma.done [#allocation3], 16
    $region17: #{tpu_custom_call.1} parent=1 // pred_fallthru
      _
    // Predicated region
    $region18: #{tpu_custom_call.1} parent=1 // pred_check
      _
    $region19: #{tpu_custom_call.1} parent=1 // pred_check_branch
      %56 = sbr.rel (0) target = $region21
    $region20: #{tpu_custom_call.1} parent=1 // pred_region
      %58 = dma.done [#allocation6], 256
    $region21: #{tpu_custom_call.1} parent=1 // pred_fallthru
      _
    // Predicated region
    $region22: #{tpu_custom_call.1} parent=1 // pred_check
      _
    $region23: #{tpu_custom_call.1} parent=1 // pred_check_branch
      %60 = sbr.rel (0) target = $region25
    $region24: #{tpu_custom_call.1} parent=1 // pred_region
      %62 = dma.done [#allocation6], 256
    $region25: #{tpu_custom_call.1} parent=1 // pred_fallthru
      _
    %v63 = vld [vmem:[#allocation2] sm:$0x1]
    %v64 = vld [vmem:[#allocation5] sm:$0xff]
    %v65 = vld [vmem:[#allocation5 + $0x8] sm:$0xff]
    %v66 = vld [vmem:[#allocation7] sm:$0xff]
    %v67 = vld [vmem:[#allocation7 + $0x8] sm:$0xff]
    %v68 = vadd.f32 %v64, %v66
    %v69 = vadd.f32 %v65, %v67
    %v70 = vperm.slane %v63, 0
    %v71 = vlaneseq
    %v72 = vshrl.u32 %v71, 7
    %74 = vset.pattern.permute.xlu0 %v72
    %75 = vperm.xlu0 %74, %v70
    %v76 = vpop.permute.xlu0 %75
    %v79 = vunpack.c.l.s4 839922192
    %v80 = vunpack.c.0.s8 %v79
    %v81 = vperm.slane %v76, %v80
    %v83 = vmul.f32 %v68, %v81
    %v84 = vmul.f32 %v69, %v81
    %87 = vst [vmem:[#allocation1] ss:$2 sm:$0xff] %v83
    %v88 = vld.sshfl [vmem:[#allocation1] sm:$0xff pattern:$0x75316420]
    %v89 = vld.sshfl [vmem:[#allocation1 + $0x8] sm:$0xff pattern:$0x75316420]
    %s90 = scalar_lea.vmem [#allocation1], 16
    %91 = vst [vmem:[%s90] ss:$2 sm:$0xff] %v84
    %v92 = vld.sshfl [vmem:[#allocation1 + $0x10] sm:$0xff pattern:$0x75316420]
    %v93 = vld.sshfl [vmem:[#allocation1 + $0x18] sm:$0xff pattern:$0x75316420]
    %vm98 = vcmask 1043456
    %v99 = vsel %vm98, %v88, 0.0
    %v100 = vrot.slane %v99, 4
    %v101 = vadd.f32 %v99, %v100
    %v102 = vrot.slane %v101, 2
    %v103 = vadd.f32 %v101, %v102
    %v104 = vrot.slane %v103, 1
    %v105 = vadd.f32 %v103, %v104
    %v106 = vsel %vm98, %v89, 0.0
    %v107 = vrot.slane %v106, 4
    %v108 = vadd.f32 %v106, %v107
    %v109 = vrot.slane %v108, 2
    %v110 = vadd.f32 %v108, %v109
    %v111 = vrot.slane %v110, 1
    %v112 = vadd.f32 %v110, %v111
    %v113 = vsel %vm98, %v92, 0.0
    %v114 = vrot.slane %v113, 4
    %v115 = vadd.f32 %v113, %v114
    %v116 = vrot.slane %v115, 2
    %v117 = vadd.f32 %v115, %v116
    %v118 = vrot.slane %v117, 1
    %v119 = vadd.f32 %v117, %v118
    %v120 = vsel %vm98, %v93, 0.0
    %v121 = vrot.slane %v120, 4
    %v122 = vadd.f32 %v120, %v121
    %v123 = vrot.slane %v122, 2
    %v124 = vadd.f32 %v122, %v123
    %v125 = vrot.slane %v124, 1
    %v126 = vadd.f32 %v124, %v125
    %v131 = vrot.slane %v112, 7
    %v132 = vrot.slane %v126, 7
    %vm133 = vcmask 1040384
    %v134 = vsel %vm133, %v105, %v131
    %v135 = vsel %vm133, %v119, %v132
    %v138 = vlaneseq
    %vm139 = vcmp.ge.s32.totalorder %v138, 0
    %vm140 = vcmp.lt.s32.totalorder %v138, 256
    %vm141 = vmand %vm139, %vm140
    %142 = vst.msk [vmem:[#allocation8] sm:$0x3] %vm141, %v134
    %143 = vst.msk [vmem:[#allocation8 + $0x2] sm:$0x3] %vm141, %v135
    %v144 = vmax.f32 %v105, %v112
    %145 = vmax.xlane.f32.xlu0 %v144
    %v146 = vpop.xlane.xlu0 %145
    %v147 = vmax.f32 %v119, %v126
    %148 = vmax.xlane.f32.xlu0 %v147
    %v149 = vpop.xlane.xlu0 %148
    %v150 = vsub.f32 %v105, %v146
    %v151 = vsub.f32 %v112, %v146
    %v152 = vsub.f32 %v119, %v149
    %v153 = vsub.f32 %v126, %v149
    %v154 = vmul.f32 %v150, 1.442695
    %v155 = vpow.pop %v154
    %v156 = vmul.f32 %v151, 1.442695
    %v157 = vpow.pop %v156
    %v158 = vmul.f32 %v152, 1.442695
    %v159 = vpow.pop %v158
    %v160 = vmul.f32 %v153, 1.442695
    %v161 = vpow.pop %v160
    %v162 = vadd.f32 %v155, %v157
    %163 = vadd.xlane.f32.xlu0 %v162
    %v164 = vpop.xlane.xlu0 %163
    %v165 = vadd.f32 %v159, %v161
    %166 = vadd.xlane.f32.xlu0 %v165
    %v167 = vpop.xlane.xlu0 %166
    %v168 = vrcp.pop %v164
    %v169 = vrcp.pop %v167
    %v170 = vmul.f32 %v155, %v168
    %v171 = vmul.f32 %v157, %v168
    %v172 = vmul.f32 %v159, %v169
    %v173 = vmul.f32 %v161, %v169
    %v178 = vrot.slane %v171, 4
    %v179 = vrot.slane %v173, 4
    %v180 = vsel %vm98, %v170, %v178
    %v181 = vsel %vm98, %v172, %v179
    %v184 = vmul.f32 %v64, %v180
    %v185 = vmul.f32 %v65, %v181
    %188 = vst [vmem:[#allocation1] ss:$2 sm:$0xff] %v184
    %v189 = vld.sshfl [vmem:[#allocation1] sm:$0xff pattern:$0x75316420]
    %v190 = vld.sshfl [vmem:[#allocation1 + $0x8] sm:$0xff pattern:$0x75316420]
    %s191 = scalar_lea.vmem [#allocation1], 16
    %192 = vst [vmem:[%s191] ss:$2 sm:$0xff] %v185
    %v193 = vld.sshfl [vmem:[#allocation1 + $0x10] sm:$0xff pattern:$0x75316420]
    %v194 = vld.sshfl [vmem:[#allocation1 + $0x18] sm:$0xff pattern:$0x75316420]
    %v199 = vsel %vm98, %v189, 0.0
    %v200 = vsel %vm98, %v190, 0.0
    %v201 = vadd.f32 %v199, %v200
    %202 = vadd.xlane.f32.xlu0 %v201
    %v203 = vpop.xlane.xlu0 %202
    %v204 = vsel %vm98, %v193, 0.0
    %v205 = vsel %vm98, %v194, 0.0
    %v206 = vadd.f32 %v204, %v205
    %207 = vadd.xlane.f32.xlu0 %v206
    %v208 = vpop.xlane.xlu0 %207
    %v211 = vlaneseq
    %v212 = vand.u32 %v211, 127
    %v213 = vperm.slane %v203, %v212
    %v214 = vperm.slane %v208, %v212
    %vm215 = vcmask 1041409
    %v216 = vsel %vm215, %v214, %v213
    %vm218 = vcmask 25600
    %219 = vst.msk [vmem:[#allocation9] sm:$0x3] %vm218, %v216
    // Predicated region
    $region26: #{tpu_custom_call.1} parent=1 // pred_check
      _
    $region27: #{tpu_custom_call.1} parent=1 // pred_check_branch
      %221 = sbr.rel (0) target = $region29
    $region28: #{tpu_custom_call.1} parent=1 // pred_region
      %223 = vsyncadd [#allocation4], 0
      %s224 = sshll.u32 [#allocation8], 4
      %s225 = int_to_ptr.vmem [resolvable:$true] %s224
      %s226 = sshll.u32 %s3, 4
      %s227 = int_to_ptr.hbm [resolvable:$true] %s226
      %232 = dma.vmem_to_hbm [thread:$0]  %s225, 64, %s227, [#allocation4], 32, 32, 2
    $region29: #{tpu_custom_call.1} parent=1 // pred_fallthru
      _
    // Predicated region
    $region30: #{tpu_custom_call.1} parent=1 // pred_check
      _
    $region31: #{tpu_custom_call.1} parent=1 // pred_check_branch
      %234 = sbr.rel (0) target = $region33
    $region32: #{tpu_custom_call.1} parent=1 // pred_region
      %236 = vsyncadd [#allocation10], 0
      %s238 = sshll.u32 [#allocation9], 4
      %s239 = int_to_ptr.vmem [resolvable:$true] %s238
      %s240 = sshll.u32 %s4, 4
      %s241 = int_to_ptr.hbm [resolvable:$true] %s240
      %243 = dma.vmem_to_hbm [thread:$0]  %s239, 32, %s241, [#allocation10]
    $region33: #{tpu_custom_call.1} parent=1 // pred_fallthru
      _
    // Predicated region
    $region34: #{tpu_custom_call.1} parent=1 // pred_check
      _
    $region35: #{tpu_custom_call.1} parent=1 // pred_check_branch
      %245 = sbr.rel (0) target = $region37
    $region36: #{tpu_custom_call.1} parent=1 // pred_region
      %247 = dma.done [#allocation4], 64
    $region37: #{tpu_custom_call.1} parent=1 // pred_fallthru
      _
    // Predicated region
    $region38: #{tpu_custom_call.1} parent=1 // pred_check
      _
    $region39: #{tpu_custom_call.1} parent=1 // pred_check_branch
      %249 = sbr.rel (0) target = $region41
    $region40: #{tpu_custom_call.1} parent=1 // pred_region
      %251 = dma.done [#allocation10], 32
    $region41: #{tpu_custom_call.1} parent=1 // pred_fallthru
      _
    %252 = vsyncpa [#allocation3], 1
    %253 = vsyncpa [#allocation6], 1
    %254 = vsyncpa [#allocation4], 1
    %255 = vsyncpa [#allocation10], 1

</llo_original>
